<compile_context>
chip_gen: v7x
topology: tpu7x:2x2x1
jax: 0.10.0
libtpu: 0.0.40
codegen_flags: <defaults>
</compile_context>

<pallas_src>
import functools

import jax
import jax.numpy as jnp
from jax.experimental import pallas as pl
from jax.experimental.pallas import tpu as pltpu

_LANE = 128
_MiB = 1024 * 1024
_VPU_MAX_CIN = 8  # contractions at/below this stay on the VPU (MXU would be >99% idle)


def _vmem_capacity_bytes():
    """Per-core physical VMEM, generation aware, with a conservative fallback."""
    try:
        return int(pltpu.get_tpu_info().vmem_capacity_bytes)
    except Exception:
        pass
    try:
        kind = jax.devices()[0].device_kind.lower()
    except Exception:
        kind = ""
    if "v7" in kind:
        return 64 * _MiB
    if "v5" in kind or "v6" in kind:
        return 128 * _MiB
    return 64 * _MiB  # unknown generation: assume the smallest VMEM


def _conv1x1_vpu_kernel(x_ref, w_ref, b_ref, o_ref):
    """Tiny-channel path: VPU broadcast-multiply-accumulate over C_in.

    x_ref: (C_in, THW), w_ref: (C_out, C_in), b_ref: (C_out, 1), o_ref: (C_out, THW).
    Spatial stays on lanes; no MXU involved. Static unroll (C_in <= 8 only).
    """
    x = x_ref[...]
    w = w_ref[...]
    acc = w[:, 0:1].astype(jnp.float32) * x[0:1, :].astype(jnp.float32)
    for k in range(1, x.shape[0]):
        acc = acc + w[:, k:k + 1].astype(jnp.float32) * x[k:k + 1, :].astype(jnp.float32)
    o_ref[...] = (acc + b_ref[...].astype(jnp.float32)).astype(o_ref.dtype)


def _conv1x1_mxu_kernel(x_ref, w_ref, b_ref, o_ref):
    """Resident-weight path: (C_out, C_in) @ (C_in, THW) on the MXU, f32 accumulate."""
    acc = jnp.dot(w_ref[...], x_ref[...],
                  preferred_element_type=jnp.float32,
                  precision=jax.lax.Precision.HIGHEST)
    o_ref[...] = (acc + b_ref[...].astype(jnp.float32)).astype(o_ref.dtype)


def _conv1x1_ksplit_kernel(x_ref, w_ref, b_ref, o_ref, acc_ref):
    """Large-channel path: C_in split across an 'arbitrary' grid axis with an
    f32 VMEM accumulator; bias-add/cast/store only on the last K step."""
    k = pl.program_id(2)

    @pl.when(k == 0)
    def _():
        acc_ref[...] = jnp.zeros_like(acc_ref)

    acc_ref[...] += jnp.dot(w_ref[...], x_ref[...],
                            preferred_element_type=jnp.float32,
                            precision=jax.lax.Precision.HIGHEST)

    @pl.when(k == pl.num_programs(2) - 1)
    def _():
        o_ref[...] = (acc_ref[...] + b_ref[...].astype(jnp.float32)).astype(o_ref.dtype)


def _pick_k_tile(c_in, c_out, itemsize, budget):
    """Split the contraction axis when a (double-buffered) resident weight would
    eat too much of the per-generation VMEM tile budget."""
    if c_in < 256:
        return None
    if 2 * c_out * c_in * itemsize <= budget // 4:
        return None
    for t_k in (512, 256, 128):
        if c_in % t_k == 0:
            return t_k
    # TODO(synk): huge weights with C_in not a multiple of 128 would need a padded
    # K-split (partial K blocks would contract over garbage lanes); stay resident.
    return None


def _pick_spatial_tile(hw, per_lane_bytes, lane_budget_bytes, batch):
    """Largest 128-aligned spatial tile that fits the VMEM lane budget, then shrunk
    (if possible) so the parallel grid exposes >= 4 blocks for megacore / 2x TC."""
    if hw <= _LANE:
        # TODO(synk): for HW < 128 a one-time (C, B*H*W) repack would give lane-dense
        # stores; data is tiny there, so keep the simple full-extent block.
        return hw
    cap = (lane_budget_bytes // max(per_lane_bytes, 1)) // _LANE * _LANE
    cap = max(cap, _LANE)
    t = min(hw if hw % _LANE == 0 else (hw // _LANE) * _LANE, cap)

    def n_blocks(tile):
        return batch * (-(-hw // tile))

    while n_blocks(t) < 4 and t > _LANE:
        t = max(_LANE, ((t // 2) // _LANE) * _LANE)
    return t


@functools.partial(jax.jit, static_argnames=("t_hw", "t_k"))
def linear_1x1_conv(x_nchw, weight, bias, *, t_hw=None, t_k=None):
    """1x1 Conv2d with bias in NCHW layout.

    x_nchw: [B, C_in, H, W]; weight: [C_out, C_in, 1, 1]; bias: [C_out].
    Returns [B, C_out, H, W].
    """
    B, C_in, H, W = x_nchw.shape
    C_out = weight.shape[0]
    HW = H * W
    dtype = x_nchw.dtype
    itemsize = jnp.dtype(dtype).itemsize

    # Reshapes over contiguous dims only -> no HBM transpose traffic.
    x3 = x_nchw.reshape(B, C_in, HW)      # (B, C_in, HW): spatial on lanes
    w_mat = weight.reshape(C_out, C_in)   # (C_out, C_in)
    b_col = bias.reshape(C_out, 1)        # (C_out, 1)

    vmem_cap = _vmem_capacity_bytes()
    budget = (vmem_cap * 7) // 16         # ~28 MiB on v7x, ~56 MiB on v5e/v6e
    limit_cap = (vmem_cap * 3) // 4       # ~48 MiB on v7x, ~96 MiB on v5e/v6e

    if t_k is None:
        t_k = _pick_k_tile(C_in, C_out, itemsize, budget)
    if t_k is not None and C_in % t_k != 0:
        t_k = None  # never contract over padded/garbage K lanes

    if t_k is not None:
        # double-buffered x & out tiles + single-buffered f32 accumulator, per lane
        per_lane = (2 * t_k + 2 * C_out) * itemsize + C_out * 4
        fixed = 2 * (C_out * t_k + C_out) * itemsize          # double-buffered w + bias blocks
    else:
        # f32 matmul result before the dtype cast counts as internal scratch
        per_lane = (2 * C_in + 2 * C_out) * itemsize + C_out * 4
        fixed = 2 * (C_out * C_in + C_out) * itemsize         # resident (double-buffered) w + bias

    if t_hw is None:
        t_hw = _pick_spatial_tile(HW, per_lane, max(budget - fixed, budget // 4), B)
    n_hw = -(-HW // t_hw)

    vmem_need = per_lane * t_hw + fixed
    vmem_limit = int(min(limit_cap,
                         max(16 * _MiB, vmem_need + max(vmem_need // 2, 8 * _MiB))))

    cost = pl.CostEstimate(
        flops=2 * B * HW * C_in * C_out,
        transcendentals=0,
        bytes_accessed=(x3.size + w_mat.size + b_col.size + B * C_out * HW) * itemsize,
    )

    if t_k is not None:
        n_k = C_in // t_k
        out3 = pl.pallas_call(
            _conv1x1_ksplit_kernel,
            out_shape=jax.ShapeDtypeStruct((B, C_out, HW), dtype),
            grid_spec=pltpu.PrefetchScalarGridSpec(
                num_scalar_prefetch=0,
                grid=(B, n_hw, n_k),
                in_specs=[
                    pl.BlockSpec((pl.Squeezed(), t_k, t_hw), lambda b, j, k: (b, k, j)),
                    pl.BlockSpec((C_out, t_k), lambda b, j, k: (0, k)),
                    pl.BlockSpec((C_out, 1), lambda b, j, k: (0, 0)),
                ],
                out_specs=pl.BlockSpec((pl.Squeezed(), C_out, t_hw),
                                       lambda b, j, k: (b, 0, j)),
                scratch_shapes=[pltpu.VMEM((C_out, t_hw), jnp.float32)],
            ),
            compiler_params=pltpu.CompilerParams(
                dimension_semantics=("parallel", "parallel", "arbitrary"),
                vmem_limit_bytes=vmem_limit,
            ),
            cost_estimate=cost,
        )(x3, w_mat, b_col)
    else:
        kernel = _conv1x1_vpu_kernel if C_in <= _VPU_MAX_CIN else _conv1x1_mxu_kernel
        out3 = pl.pallas_call(
            kernel,
            out_shape=jax.ShapeDtypeStruct((B, C_out, HW), dtype),
            grid_spec=pltpu.PrefetchScalarGridSpec(
                num_scalar_prefetch=0,
                grid=(B, n_hw),
                in_specs=[
                    pl.BlockSpec((pl.Squeezed(), C_in, t_hw), lambda b, j: (b, 0, j)),
                    pl.BlockSpec((C_out, C_in), lambda b, j: (0, 0)),
                    pl.BlockSpec((C_out, 1), lambda b, j: (0, 0)),
                ],
                out_specs=pl.BlockSpec((pl.Squeezed(), C_out, t_hw),
                                       lambda b, j: (b, 0, j)),
            ),
            compiler_params=pltpu.CompilerParams(
                dimension_semantics=("parallel", "parallel"),
                vmem_limit_bytes=vmem_limit,
            ),
            cost_estimate=cost,
        )(x3, w_mat, b_col)

    return out3.reshape(B, C_out, H, W)


if __name__ == "__main__":
    # Demo shapes matching the PyTorch module: Conv2d(c_in=4, c_out=8, 1x1).
    B, C_in, C_out, Hs, Ws = 2, 4, 8, 16, 16

    key = jax.random.PRNGKey(0)
    kx, kw, kb = jax.random.split(key, 3)

    x = jax.random.normal(kx, (B, C_in, Hs, Ws), dtype=jnp.float32)
    weight = jax.random.normal(kw, (C_out, C_in, 1, 1), dtype=jnp.float32) * 0.1
    bias = jax.random.normal(kb, (C_out,), dtype=jnp.float32) * 0.1

    out = linear_1x1_conv(x, weight, bias)
    jax.block_until_ready(out)
    ref = jnp.einsum("bchw,oc->bohw", x, weight.reshape(C_out, C_in),
                     precision=jax.lax.Precision.HIGHEST) + bias[None, :, None, None]
    assert out.shape == (B, C_out, Hs, Ws)
    assert jnp.allclose(out, ref, atol=1e-5, rtol=1e-5)

    # MXU resident-weight path.
    C_in2, C_out2 = 128, 128
    kx2, kw2, kb2 = jax.random.split(jax.random.PRNGKey(1), 3)
    x2 = jax.random.normal(kx2, (B, C_in2, Hs, Ws), dtype=jnp.float32)
    w2 = jax.random.normal(kw2, (C_out2, C_in2, 1, 1), dtype=jnp.float32) * 0.05
    b2 = jax.random.normal(kb2, (C_out2,), dtype=jnp.float32) * 0.05
    out2 = linear_1x1_conv(x2, w2, b2)
    jax.block_until_ready(out2)
    ref2 = jnp.einsum("bchw,oc->bohw", x2, w2.reshape(C_out2, C_in2),
                      precision=jax.lax.Precision.HIGHEST) + b2[None, :, None, None]
    assert jnp.allclose(out2, ref2, atol=1e-4, rtol=1e-4)

    # K-split accumulator path (forced via t_k to keep the test shapes small).
    C_in3, C_out3 = 256, 64
    kx3, kw3, kb3 = jax.random.split(jax.random.PRNGKey(2), 3)
    xk = jax.random.normal(kx3, (B, C_in3, Hs, Ws), dtype=jnp.float32)
    wk = jax.random.normal(kw3, (C_out3, C_in3, 1, 1), dtype=jnp.float32) * 0.05
    bk = jax.random.normal(kb3, (C_out3,), dtype=jnp.float32) * 0.05
    outk = linear_1x1_conv(xk, wk, bk, t_k=128)
    jax.block_until_ready(outk)
    refk = jnp.einsum("bchw,oc->bohw", xk, wk.reshape(C_out3, C_in3),
                      precision=jax.lax.Precision.HIGHEST) + bk[None, :, None, None]
    assert jnp.allclose(outk, refk, atol=1e-4, rtol=1e-4)

    print("KERNEL_OK")
</pallas_src>

<mosaic_0001>
module attributes {stable_mosaic.version = 11 : i64} {
  func.func @_conv1x1_vpu_kernel(%arg0: i32, %arg1: i32, %arg2: memref<1x4x128xf32, #tpu.memory_space<vmem>>, %arg3: memref<8x4xf32, #tpu.memory_space<vmem>>, %arg4: memref<8x1xf32, #tpu.memory_space<vmem>>, %arg5: memref<1x8x128xf32, #tpu.memory_space<vmem>>) attributes {dimension_semantics = [#tpu.dimension_semantics<parallel>, #tpu.dimension_semantics<parallel>], iteration_bounds = array<i64: 2, 2>, scalar_prefetch = 0 : i64, scratch_operands = 0 : i64, tpu.core_type = #tpu.core_type<tc>, window_params = [{transform_indices = @transform_0, window_bounds = array<i64: 1, 4, 128>}, {pipeline_mode = #tpu.pipeline_mode<synchronous>, transform_indices = @transform_1, window_bounds = array<i64: 8, 4>}, {pipeline_mode = #tpu.pipeline_mode<synchronous>, transform_indices = @transform_2, window_bounds = array<i64: 8, 1>}, {transform_indices = @transform_3, window_bounds = array<i64: 1, 8, 128>}]} {
    %c0 = arith.constant 0 : index
    %c0_0 = arith.constant 0 : index
    %c0_1 = arith.constant 0 : index
    %0 = vector.load %arg2[%c0, %c0_0, %c0_1] : memref<1x4x128xf32, #tpu.memory_space<vmem>>, vector<1x4x128xf32>
    %1 = vector.shape_cast %0 : vector<1x4x128xf32> to vector<4x128xf32>
    %c0_2 = arith.constant 0 : index
    %c0_3 = arith.constant 0 : index
    %2 = vector.load %arg3[%c0_2, %c0_3] : memref<8x4xf32, #tpu.memory_space<vmem>>, vector<8x4xf32>
    %3 = vector.extract_strided_slice %2 {offsets = [0, 0], sizes = [8, 1], strides = [1, 1]} : vector<8x4xf32> to vector<8x1xf32>
    %4 = vector.extract_strided_slice %1 {offsets = [0, 0], sizes = [1, 128], strides = [1, 1]} : vector<4x128xf32> to vector<1x128xf32>
    %5 = vector.broadcast %3 : vector<8x1xf32> to vector<8x128xf32>
    %6 = vector.broadcast %4 : vector<1x128xf32> to vector<8x128xf32>
    %7 = arith.mulf %5, %6 : vector<8x128xf32>
    %8 = vector.extract_strided_slice %2 {offsets = [0, 1], sizes = [8, 1], strides = [1, 1]} : vector<8x4xf32> to vector<8x1xf32>
    %9 = vector.extract_strided_slice %1 {offsets = [1, 0], sizes = [1, 128], strides = [1, 1]} : vector<4x128xf32> to vector<1x128xf32>
    %10 = vector.broadcast %8 : vector<8x1xf32> to vector<8x128xf32>
    %11 = vector.broadcast %9 : vector<1x128xf32> to vector<8x128xf32>
    %12 = arith.mulf %10, %11 : vector<8x128xf32>
    %13 = arith.addf %7, %12 : vector<8x128xf32>
    %14 = vector.extract_strided_slice %2 {offsets = [0, 2], sizes = [8, 1], strides = [1, 1]} : vector<8x4xf32> to vector<8x1xf32>
    %15 = vector.extract_strided_slice %1 {offsets = [2, 0], sizes = [1, 128], strides = [1, 1]} : vector<4x128xf32> to vector<1x128xf32>
    %16 = vector.broadcast %14 : vector<8x1xf32> to vector<8x128xf32>
    %17 = vector.broadcast %15 : vector<1x128xf32> to vector<8x128xf32>
    %18 = arith.mulf %16, %17 : vector<8x128xf32>
    %19 = arith.addf %13, %18 : vector<8x128xf32>
    %20 = vector.extract_strided_slice %2 {offsets = [0, 3], sizes = [8, 1], strides = [1, 1]} : vector<8x4xf32> to vector<8x1xf32>
    %21 = vector.extract_strided_slice %1 {offsets = [3, 0], sizes = [1, 128], strides = [1, 1]} : vector<4x128xf32> to vector<1x128xf32>
    %22 = vector.broadcast %20 : vector<8x1xf32> to vector<8x128xf32>
    %23 = vector.broadcast %21 : vector<1x128xf32> to vector<8x128xf32>
    %24 = arith.mulf %22, %23 : vector<8x128xf32>
    %25 = arith.addf %19, %24 : vector<8x128xf32>
    %c0_4 = arith.constant 0 : index
    %c0_5 = arith.constant 0 : index
    %26 = vector.load %arg4[%c0_4, %c0_5] : memref<8x1xf32, #tpu.memory_space<vmem>>, vector<8x1xf32>
    %27 = vector.broadcast %26 : vector<8x1xf32> to vector<8x128xf32>
    %28 = arith.addf %25, %27 : vector<8x128xf32>
    %c0_6 = arith.constant 0 : index
    %c0_7 = arith.constant 0 : index
    %c0_8 = arith.constant 0 : index
    %29 = vector.load %arg5[%c0_6, %c0_7, %c0_8] : memref<1x8x128xf32, #tpu.memory_space<vmem>>, vector<1x8x128xf32>
    %30 = vector.shape_cast %29 : vector<1x8x128xf32> to vector<8x128xf32>
    %31 = vector.shape_cast %28 : vector<8x128xf32> to vector<1x8x128xf32>
    tpu.vector_store %arg5[%c0_6, %c0_7, %c0_8], %31 {strides = array<i32>} : memref<1x8x128xf32, #tpu.memory_space<vmem>>, vector<1x8x128xf32>,
    return
  }
  func.func @transform_0(%arg0: i32, %arg1: i32) -> (i32, i32, i32) {
    %c0_i32 = arith.constant 0 : i32
    %c0_i32_0 = arith.constant 0 : i32
    return %arg0, %c0_i32, %arg1 : i32, i32, i32
  }
  func.func @transform_1(%arg0: i32, %arg1: i32) -> (i32, i32) {
    %c0_i32 = arith.constant 0 : i32
    %c0_i32_0 = arith.constant 0 : i32
    %c0_i32_1 = arith.constant 0 : i32
    return %c0_i32, %c0_i32_0 : i32, i32
  }
  func.func @transform_2(%arg0: i32, %arg1: i32) -> (i32, i32) {
    %c0_i32 = arith.constant 0 : i32
    %c0_i32_0 = arith.constant 0 : i32
    %c0_i32_1 = arith.constant 0 : i32
    return %c0_i32, %c0_i32_0 : i32, i32
  }
  func.func @transform_3(%arg0: i32, %arg1: i32) -> (i32, i32, i32) {
    %c0_i32 = arith.constant 0 : i32
    %c0_i32_0 = arith.constant 0 : i32
    return %arg0, %c0_i32, %arg1 : i32, i32, i32
  }
}

</mosaic_0001>

<llo_original>
// kernel: linear_1x1_conv.1
$region0: #{linear_1x1_conv.1}
  #allocation0 [shape = 'u32[]', space=smem, size = 0x4, offset = 0x4, fixed_abs, tag = 'smem constant byte address 0x4 - core index']
  #allocation1 [shape = 'u32[144,128]{1,0:T(1,128)}', space=vmem, size = 0x12000, scoped, tag = 'internal scratch']
  %s0 = inlined_call_operand.vmem [shape: f32[2,4,256], index: 0, kind: input, shape index: {}]
  %s1 = inlined_call_operand.vmem [shape: f32[8,4], index: 1, kind: input, shape index: {}]
  %s2 = inlined_call_operand.vmem [shape: f32[8,1], index: 2, kind: input, shape index: {}]
  %s3 = inlined_call_operand.vmem [shape: f32[2,8,256], index: 3, kind: output, shape index: {}]
  %s4 = sld [smem:[#allocation0]]
  $region45: #{linear_1x1_conv.1} parent=0
    _
  %s6 = ssub.s32 1, %s4
  %s7 = scalar_select 0, %s6, %s4
  loop: start=0, step=1, limit=6
  $region2: #{linear_1x1_conv.1} parent=0 // loop_pre_header
    _
  $region3: #{linear_1x1_conv.1} parent=0 // loop_header
    %s9 = sphi 0, %s13
    %p10 = scmp.ge.s32.totalorder %s9, 6
    %s16 = sphi 0, %s28
    %s17 = sphi 0, %s24
    %s18 = sphi 0, %s16
    %s19 = sphi 0, %s17
    %s20 = sphi 0, %s18
    %s21 = sphi 0, %s19
    %s33 = sphi 0, %s35
    %s36 = sphi 0, %s33
    %s37 = sphi 0, %s36
    %s53 = sphi 0, %s37
    %s57 = sphi 0, %s57
    %s59 = sphi 0, %s57
    %s60 = sphi 0, %s59
    %s74 = sphi 0, %s60
    %s78 = sphi 0, %s78
    %s80 = sphi 0, %s78
    %s81 = sphi 0, %s80
    %s95 = sphi 0, %s81
    %s103 = sphi 0, %s105
    %s106 = sphi 0, %s103
    %s107 = sphi 0, %s106
    %s123 = sphi 0, %s107
  $region4: #{linear_1x1_conv.1} parent=0 // loop_header_branch
    %12 = sbr.rel (%p10) target = $region8
  $region5: #{linear_1x1_conv.1} parent=0 // loop_body
    %s14 = ssub.s32 %s9, 1
    %s15 = ssub.s32 %s9, 2
    %s22 = sadd.s32 1, %s17
    %p23 = scmp.ge.s32.totalorder %s22, 2
    %s24 = scalar_select %p23, 0, %s22
    %s25 = sadd.s32 1, %s16
    %s26 = scalar_select %p23, %s25, %s16
    %p27 = scmp.ge.s32.totalorder %s26, 2
    %s28 = scalar_select %p27, 0, %s26
    %s29 = ssub.s32 %s16, %s28
    %s30 = ssub.s32 %s17, %s24
    %s31 = sor.u32 %s29, %s30
    %p32 = scmp.eq.s32.totalorder %s31, 0
    %s34 = sadd.s32 %s33, 1
    %s35 = scalar_select %p32, %s33, %s34
    %p38 = pneg %p32
    %p39 = scmp.eq.s32.totalorder %s9, 3
    %p40 = por %p38, %p39
    %p41 = scmp.ne.s32.totalorder %s33, %s36
    %p42 = scmp.eq.s32.totalorder %s9, 0
    %p43 = por %p41, %p42
    %p44 = scmp.ne.s32.totalorder %s33, %s36
    %p45 = scmp.eq.s32.totalorder %s14, 3
    %p46 = por %p44, %p45
    %p47 = scmp.ne.s32.totalorder %s36, %s37
    %p48 = scmp.eq.s32.totalorder %s14, 0
    %p49 = por %p47, %p48
    %p50 = scmp.ne.s32.totalorder %s36, %s37
    %p51 = scmp.eq.s32.totalorder %s15, 3
    %p52 = por %p50, %p51
    %p54 = scmp.ne.s32.totalorder %s37, %s53
    %p55 = scmp.eq.s32.totalorder %s15, 0
    %p56 = por %p54, %p55
    %s58 = sadd.s32 %s57, 1
    %p61 = scmp.eq.s32.totalorder %s9, 3
    %p62 = scmp.ne.s32.totalorder %s57, %s59
    %p63 = scmp.eq.s32.totalorder %s9, 0
    %p64 = por %p62, %p63
    %p65 = scmp.ne.s32.totalorder %s57, %s59
    %p66 = scmp.eq.s32.totalorder %s14, 3
    %p67 = por %p65, %p66
    %p68 = scmp.ne.s32.totalorder %s59, %s60
    %p69 = scmp.eq.s32.totalorder %s14, 0
    %p70 = por %p68, %p69
    %p71 = scmp.ne.s32.totalorder %s59, %s60
    %p72 = scmp.eq.s32.totalorder %s15, 3
    %p73 = por %p71, %p72
    %p75 = scmp.ne.s32.totalorder %s60, %s74
    %p76 = scmp.eq.s32.totalorder %s15, 0
    %p77 = por %p75, %p76
    %s79 = sadd.s32 %s78, 1
    %p82 = scmp.eq.s32.totalorder %s9, 3
    %p83 = scmp.ne.s32.totalorder %s78, %s80
    %p84 = scmp.eq.s32.totalorder %s9, 0
    %p85 = por %p83, %p84
    %p86 = scmp.ne.s32.totalorder %s78, %s80
    %p87 = scmp.eq.s32.totalorder %s14, 3
    %p88 = por %p86, %p87
    %p89 = scmp.ne.s32.totalorder %s80, %s81
    %p90 = scmp.eq.s32.totalorder %s14, 0
    %p91 = por %p89, %p90
    %p92 = scmp.ne.s32.totalorder %s80, %s81
    %p93 = scmp.eq.s32.totalorder %s15, 3
    %p94 = por %p92, %p93
    %p96 = scmp.ne.s32.totalorder %s81, %s95
    %p97 = scmp.eq.s32.totalorder %s15, 0
    %p98 = por %p96, %p97
    %s99 = ssub.s32 %s16, %s28
    %s100 = ssub.s32 %s17, %s24
    %s101 = sor.u32 %s99, %s100
    %p102 = scmp.eq.s32.totalorder %s101, 0
    %s104 = sadd.s32 %s103, 1
    %s105 = scalar_select %p102, %s103, %s104
    %p108 = pneg %p102
    %p109 = scmp.eq.s32.totalorder %s9, 3
    %p110 = por %p108, %p109
    %p111 = scmp.ne.s32.totalorder %s103, %s106
    %p112 = scmp.eq.s32.totalorder %s9, 0
    %p113 = por %p111, %p112
    %p114 = scmp.ne.s32.totalorder %s103, %s106
    %p115 = scmp.eq.s32.totalorder %s14, 3
    %p116 = por %p114, %p115
    %p117 = scmp.ne.s32.totalorder %s106, %s107
    %p118 = scmp.eq.s32.totalorder %s14, 0
    %p119 = por %p117, %p118
    %p120 = scmp.ne.s32.totalorder %s106, %s107
    %p121 = scmp.eq.s32.totalorder %s15, 3
    %p122 = por %p120, %p121
    %p124 = scmp.ne.s32.totalorder %s107, %s123
    %p125 = scmp.eq.s32.totalorder %s15, 0
    %p126 = por %p124, %p125
    %p127 = scmp.le.s32.totalorder 1, %s9
    %p128 = scmp.lt.s32.totalorder %s9, 5
    %p129 = pnand %p127, %p128
    %p130 = pneg %p129
    // Predicated region
    $region9: #{linear_1x1_conv.1} parent=5 // pred_check
      _
    $region10: #{linear_1x1_conv.1} parent=5 // pred_check_branch
      %132 = sbr.rel (%p129) target = $region12
    $region11: #{linear_1x1_conv.1} parent=5 // pred_region
      %s133 = ssub.s32 %s9, 1
      // Predicated region
      $region13: #{linear_1x1_conv.1} parent=11 // pred_check
        %p134 = pneg %p70
      $region14: #{linear_1x1_conv.1} parent=11 // pred_check_branch
        %136 = sbr.rel (%p134) target = $region16
      $region15: #{linear_1x1_conv.1} parent=11 // pred_region
        _
      $region16: #{linear_1x1_conv.1} parent=11 // pred_fallthru
        _
      // Predicated region
      $region17: #{linear_1x1_conv.1} parent=11 // pred_check
        %p137 = pneg %p91
      $region18: #{linear_1x1_conv.1} parent=11 // pred_check_branch
        %139 = sbr.rel (%p137) target = $region20
      $region19: #{linear_1x1_conv.1} parent=11 // pred_region
        _
      $region20: #{linear_1x1_conv.1} parent=11 // pred_fallthru
        _
    $region12: #{linear_1x1_conv.1} parent=5 // pred_fallthru
      _
    %p140 = scmp.lt.s32.totalorder %s9, 4
    // Predicated region
    $region21: #{linear_1x1_conv.1} parent=5 // pred_check
      %p141 = pneg %p140
    $region22: #{linear_1x1_conv.1} parent=5 // pred_check_branch
      %143 = sbr.rel (%p141) target = $region24
    $region23: #{linear_1x1_conv.1} parent=5 // pred_region
      // Predicated region
      $region25: #{linear_1x1_conv.1} parent=23 // pred_check
        %p144 = pneg %p43
      $region26: #{linear_1x1_conv.1} parent=23 // pred_check_branch
        %146 = sbr.rel (%p144) target = $region28
      $region27: #{linear_1x1_conv.1} parent=23 // pred_region
        %p147 = scmp.lt.s32.totalorder %s16, 1
        %s148 = scalar_select %p147, %s16, 1
        %p149 = scmp.lt.s32.totalorder %s17, 1
        %s150 = scalar_select %p149, %s17, 1
        %s151 = smul.addr %s148, 2
        %s152 = sadd.s32 %s150, %s151
        %s153 = smul.addr %s152, 4
        %s154 = scalar_lea.vmem %s0, %s153
      $region28: #{linear_1x1_conv.1} parent=23 // pred_fallthru
        _
    $region24: #{linear_1x1_conv.1} parent=5 // pred_fallthru
      _
    %p155 = scmp.le.s32.totalorder 1, %s9
    %p156 = scmp.lt.s32.totalorder %s9, 5
    %p157 = pnand %p155, %p156
    %p158 = pneg %p157
    // Predicated region
    $region29: #{linear_1x1_conv.1} parent=5 // pred_check
      _
    $region30: #{linear_1x1_conv.1} parent=5 // pred_check_branch
      %160 = sbr.rel (%p157) target = $region32
    $region31: #{linear_1x1_conv.1} parent=5 // pred_region
      %s161 = ssub.s32 %s9, 1
      %p162 = scmp.lt.s32.totalorder %s18, 1
      %s163 = scalar_select %p162, %s18, 1
      %p164 = scmp.lt.s32.totalorder %s19, 1
      %s165 = scalar_select %p164, %s19, 1
      %s166 = smul.addr %s163, 2
      %s167 = sadd.s32 %s165, %s166
      %s168 = smul.addr %s167, 4
      %s169 = scalar_lea.vmem %s0, %s168
      %p170 = pneg %p49
      %p171 = pneg %p46
      %p172 = pneg %p70
      %p173 = pneg %p67
      %p174 = pneg %p91
      %p175 = pneg %p88
      %p176 = pneg %p119
      %p177 = pneg %p116
      %p178 = scmp.lt.s32.totalorder %s18, 1
      %s179 = scalar_select %p178, %s18, 1
      %p180 = scmp.lt.s32.totalorder %s19, 1
      %s181 = scalar_select %p180, %s19, 1
      %s182 = smul.addr %s179, 2
      %s183 = sadd.s32 %s181, %s182
      %s184 = smul.addr %s183, 8
      %s185 = scalar_lea.vmem %s3, %s184
      %p186 = scmp.lt.s32.totalorder %s18, 1
      %s187 = scalar_select %p186, %s18, 1
      %p188 = scmp.lt.s32.totalorder %s19, 1
      %s189 = scalar_select %p188, %s19, 1
      %s190 = smul.addr %s187, 2
      %s191 = sadd.s32 %s189, %s190
      %s192 = smul.addr %s191, 4
      %s193 = scalar_lea.vmem %s0, %s192
      %p194 = scmp.lt.s32.totalorder %s18, 1
      %s195 = scalar_select %p194, %s18, 1
      %p196 = scmp.lt.s32.totalorder %s19, 1
      %s197 = scalar_select %p196, %s19, 1
      %s198 = smul.addr %s195, 2
      %s199 = sadd.s32 %s197, %s198
      %s200 = smul.addr %s199, 8
      %s201 = scalar_lea.vmem %s3, %s200
      %v202 = vld [vmem:[%s193] sm:$0xf]
      %v203 = vld [vmem:[%s1] sm:$0xff]
      %205 = vset.pattern.permute.xlu0 0
      %206 = vperm.xlu0 %205, %v203
      %v207 = vpop.permute.xlu0 %206
      %v209 = vlaneseq
      %v210 = vshrl.u32 %v209, 7
      %v211 = vsub.s32 0, %v210
      %v212 = vrot.slane %v202, %v211
      %v213 = vmul.f32 %v207, %v212
      %214 = vset.pattern.permute.xlu0 1
      %215 = vperm.xlu0 %214, %v203
      %v216 = vpop.permute.xlu0 %215
      %v218 = vlaneseq
      %v219 = vshrl.u32 %v218, 7
      %v220 = vsub.s32 1, %v219
      %v221 = vrot.slane %v202, %v220
      %v222 = vmul.f32 %v216, %v221
      %v223 = vadd.f32 %v213, %v222
      %224 = vset.pattern.permute.xlu0 2
      %225 = vperm.xlu0 %224, %v203
      %v226 = vpop.permute.xlu0 %225
      %v228 = vlaneseq
      %v229 = vshrl.u32 %v228, 7
      %v230 = vsub.s32 2, %v229
      %v231 = vrot.slane %v202, %v230
      %v232 = vmul.f32 %v226, %v231
      %v233 = vadd.f32 %v223, %v232
      %234 = vset.pattern.permute.xlu0 3
      %235 = vperm.xlu0 %234, %v203
      %v236 = vpop.permute.xlu0 %235
      %v238 = vlaneseq
      %v239 = vshrl.u32 %v238, 7
      %v240 = vsub.s32 3, %v239
      %v241 = vrot.slane %v202, %v240
      %v242 = vmul.f32 %v236, %v241
      %v243 = vadd.f32 %v233, %v242
      %v244 = vld [vmem:[%s2] sm:$0xff]
      %246 = vset.pattern.permute.xlu0 0
      %247 = vperm.xlu0 %246, %v244
      %v248 = vpop.permute.xlu0 %247
      %v250 = vadd.f32 %v243, %v248
      %251 = vst [vmem:[%s201] sm:$0xff] %v250
      %p252 = scmp.lt.s32.totalorder %s18, 1
      %s253 = scalar_select %p252, %s18, 1
      %p254 = scmp.lt.s32.totalorder %s19, 1
      %s255 = scalar_select %p254, %s19, 1
      %s256 = smul.addr %s253, 2
      %s257 = sadd.s32 %s255, %s256
      %s258 = smul.addr %s257, 8
      %s259 = scalar_lea.vmem %s3, %s258
      // Predicated region
      $region33: #{linear_1x1_conv.1} parent=31 // pred_check
        %p260 = pneg %p116
      $region34: #{linear_1x1_conv.1} parent=31 // pred_check_branch
        %262 = sbr.rel (%p260) target = $region36
      $region35: #{linear_1x1_conv.1} parent=31 // pred_region
        _
      $region36: #{linear_1x1_conv.1} parent=31 // pred_fallthru
        _
    $region32: #{linear_1x1_conv.1} parent=5 // pred_fallthru
      _
    %p263 = scmp.le.s32.totalorder 2, %s9
    // Predicated region
    $region37: #{linear_1x1_conv.1} parent=5 // pred_check
      %p264 = pneg %p263
    $region38: #{linear_1x1_conv.1} parent=5 // pred_check_branch
      %266 = sbr.rel (%p264) target = $region40
    $region39: #{linear_1x1_conv.1} parent=5 // pred_region
      %s267 = ssub.s32 %s9, 2
      // Predicated region
      $region41: #{linear_1x1_conv.1} parent=39 // pred_check
        %p268 = pneg %p122
      $region42: #{linear_1x1_conv.1} parent=39 // pred_check_branch
        %270 = sbr.rel (%p268) target = $region44
      $region43: #{linear_1x1_conv.1} parent=39 // pred_region
        %p271 = scmp.lt.s32.totalorder %s20, 1
        %s272 = scalar_select %p271, %s20, 1
        %p273 = scmp.lt.s32.totalorder %s21, 1
        %s274 = scalar_select %p273, %s21, 1
        %s275 = smul.addr %s272, 2
        %s276 = sadd.s32 %s274, %s275
        %s277 = smul.addr %s276, 8
        %s278 = scalar_lea.vmem %s3, %s277
      $region44: #{linear_1x1_conv.1} parent=39 // pred_fallthru
        _
    $region40: #{linear_1x1_conv.1} parent=5 // pred_fallthru
      _
  $region6: #{linear_1x1_conv.1} parent=0 // loop_footer
    %s13 = sadd.s32 1, %s9
  $region7: #{linear_1x1_conv.1} parent=0 // loop_footer_branch
    %8 = sbr.rel target = $region3
  $region8: #{linear_1x1_conv.1} parent=0 // loop_exit
    _

</llo_original>
